<compile_context>
chip_gen: v6e
topology: v6e:2x2x1
jax: 0.10.0
libtpu: 0.0.40
codegen_flags: <defaults>
</compile_context>

<pallas_src>
import math
import numpy as np

import jax
import jax.numpy as jnp
from jax.experimental import pallas as pl
from jax.experimental.pallas import tpu as pltpu

# Hyper-parameters from transformer2.py usage of PositionalEncoder.
D_MODEL = 51
SEQ_LEN = 10
FLAT = SEQ_LEN * D_MODEL          # 510
SQRT_D_MODEL = math.sqrt(D_MODEL)


# ---------------------------------------------------------------------------
# pe buffer, exactly as the PyTorch constructor loop builds it.
# (d_model is odd, so the last column stays 0 — mirrors the original loop.)
# ---------------------------------------------------------------------------
def build_pe(seq_len=SEQ_LEN, d_model=D_MODEL):
    pe = np.zeros((seq_len, d_model), np.float32)
    for pos in range(seq_len):
        for i in range(0, d_model - 1, 2):
            pe[pos, i] = math.sin(pos / 10000 ** (2 * i / d_model))
            pe[pos, i + 1] = math.cos(pos / 10000 ** (2 * (i + 1) / d_model))
    return jnp.asarray(pe)


# ---------------------------------------------------------------------------
# Kernel: one fused elementwise step on a lane-dense (BB, 510) batch tile.
#   x_ref : (BB, FLAT)   pe_ref : (1, FLAT)   o_ref : (BB, FLAT)
# ---------------------------------------------------------------------------
def positional_encoder_kernel(x_ref, pe_ref, o_ref):
    o_ref[...] = x_ref[...] * SQRT_D_MODEL + pe_ref[...]


# ---------------------------------------------------------------------------
# Wrapper
# ---------------------------------------------------------------------------
def positional_encoder_forward(x, pe):
    B, S, D = x.shape
    flat_dim = S * D

    # lane-dense views (row-major reshape: metadata only, no data movement)
    x_flat = x.reshape(B, flat_dim)
    pe_flat = pe.reshape(1, flat_dim)

    # Batch tile: biggest power-of-two tile (<=1024) that evenly divides B,
    # otherwise take the whole batch in one block (block dim == full array dim
    # is always legal).  Per-tile VMEM stays far under the scoped limit on
    # every generation (1024*510*4 B ~= 2 MiB per buffer).
    bb = B
    for cand in (1024, 512, 256, 128, 64, 32, 16, 8):
        if cand <= B and B % cand == 0:
            bb = cand
            break
    grid = (B // bb,)

    out_flat = pl.pallas_call(
        positional_encoder_kernel,
        out_shape=jax.ShapeDtypeStruct((B, flat_dim), x.dtype),
        grid=grid,
        in_specs=[
            pl.BlockSpec((bb, flat_dim), lambda i: (i, 0)),   # x tile
            pl.BlockSpec((1, flat_dim), lambda i: (0, 0)),    # pe (resident)
        ],
        out_specs=pl.BlockSpec((bb, flat_dim), lambda i: (i, 0)),
        compiler_params=pltpu.CompilerParams(
            dimension_semantics=("parallel",)),
    )(x_flat, pe_flat)

    return out_flat.reshape(B, S, D)


# ---------------------------------------------------------------------------
# Demo / validation
# ---------------------------------------------------------------------------
if __name__ == "__main__":
    key = jax.random.PRNGKey(0)

    B = 8
    x = jax.random.normal(key, (B, SEQ_LEN, D_MODEL), jnp.float32)
    pe = build_pe()

    out = positional_encoder_forward(x, pe)
    out = jax.block_until_ready(out)
    assert out.shape == (B, SEQ_LEN, D_MODEL), out.shape

    # Pure-JAX reference of the PyTorch forward.
    ref = x * math.sqrt(D_MODEL) + pe[None]
    max_err = float(jnp.max(jnp.abs(out - ref)))
    if not jnp.allclose(out, ref, atol=1e-5, rtol=1e-5):
        raise AssertionError(f"Pallas kernel mismatch vs reference, max err {max_err}")

    print("KERNEL_OK")
</pallas_src>

<mosaic_0001>
module attributes {stable_mosaic.version = 11 : i64} {
  func.func @positional_encoder_kernel(%arg0: i32, %arg1: memref<8x510xf32, #tpu.memory_space<vmem>>, %arg2: memref<1x510xf32, #tpu.memory_space<vmem>>, %arg3: memref<8x510xf32, #tpu.memory_space<vmem>>) attributes {dimension_semantics = [#tpu.dimension_semantics<parallel>], iteration_bounds = array<i64: 1>, scalar_prefetch = 0 : i64, scratch_operands = 0 : i64, tpu.core_type = #tpu.core_type<tc>, window_params = [{transform_indices = @transform_0, window_bounds = array<i64: 8, 510>}, {pipeline_mode = #tpu.pipeline_mode<synchronous>, transform_indices = @transform_1, window_bounds = array<i64: 1, 510>}, {transform_indices = @transform_2, window_bounds = array<i64: 8, 510>}]} {
    %c0 = arith.constant 0 : index
    %c0_0 = arith.constant 0 : index
    %0 = vector.load %arg1[%c0, %c0_0] : memref<8x510xf32, #tpu.memory_space<vmem>>, vector<8x510xf32>
    %cst = arith.constant 7.14142847 : f32
    %1 = vector.broadcast %cst : f32 to vector<8x510xf32>
    %2 = arith.mulf %0, %1 : vector<8x510xf32>
    %c0_1 = arith.constant 0 : index
    %c0_2 = arith.constant 0 : index
    %3 = vector.load %arg2[%c0_1, %c0_2] : memref<1x510xf32, #tpu.memory_space<vmem>>, vector<1x510xf32>
    %4 = vector.broadcast %3 : vector<1x510xf32> to vector<8x510xf32>
    %5 = arith.addf %2, %4 : vector<8x510xf32>
    %c0_3 = arith.constant 0 : index
    %c0_4 = arith.constant 0 : index
    %6 = vector.load %arg3[%c0_3, %c0_4] : memref<8x510xf32, #tpu.memory_space<vmem>>, vector<8x510xf32>
    tpu.vector_store %arg3[%c0_3, %c0_4], %5 {strides = array<i32>} : memref<8x510xf32, #tpu.memory_space<vmem>>, vector<8x510xf32>,
    return
  }
  func.func @transform_0(%arg0: i32) -> (i32, i32) {
    %c0_i32 = arith.constant 0 : i32
    %c0_i32_0 = arith.constant 0 : i32
    return %arg0, %c0_i32 : i32, i32
  }
  func.func @transform_1(%arg0: i32) -> (i32, i32) {
    %c0_i32 = arith.constant 0 : i32
    %c0_i32_0 = arith.constant 0 : i32
    %c0_i32_1 = arith.constant 0 : i32
    return %c0_i32, %c0_i32_0 : i32, i32
  }
  func.func @transform_2(%arg0: i32) -> (i32, i32) {
    %c0_i32 = arith.constant 0 : i32
    %c0_i32_0 = arith.constant 0 : i32
    return %arg0, %c0_i32 : i32, i32
  }
}

</mosaic_0001>

<llo_original>
// kernel: tpu_custom_call.1
$region0: #{tpu_custom_call.1}
  #allocation0 [shape = 'u32[]', space=smem, size = 0x4, offset = 0x4, fixed_abs, tag = 'smem constant byte address 0x4 - core index']
  #allocation1 [shape = 'u32[144,128]{1,0:T(1,128)}', space=vmem, size = 0x12000, scoped, tag = 'internal scratch']
  %s0 = inlined_call_operand.hbm [shape: f32[8,510], index: 0, kind: input, shape index: {}]
  %s1 = inlined_call_operand.hbm [shape: f32[1,510], index: 1, kind: input, shape index: {}]
  %s2 = inlined_call_operand.hbm [shape: f32[8,510], index: 2, kind: output, shape index: {}]
  %s3 = sld [smem:[#allocation0]]
  $region26: #{tpu_custom_call.1} parent=0
    _
  %s5 = ssub.s32 1, %s3
  %s6 = scalar_select 0, %s5, %s3
  $region1: #{tpu_custom_call.1} parent=0
    #allocation2 [shape = 'u8[16384]{0}', space=vmem, size = 0x4000, scoped, tag = 'input window, operand 0, single buffered']
    #allocation3 [shape = 's32[1]{0}', space=sflag, size = 0x4, scoped, tag = 'scoped memory for tpu_custom_call.1']
    #allocation4 [shape = 's32[1]{0}', space=sflag, size = 0x4, scoped, tag = 'scoped memory for tpu_custom_call.1']
    #allocation5 [shape = 'u8[2048]{0}', space=vmem, size = 0x800, scoped, tag = 'input window, operand 1, single buffered']
    #allocation6 [shape = 's32[1]{0}', space=sflag, size = 0x4, scoped, tag = 'scoped memory for tpu_custom_call.1']
    #allocation7 [shape = 'u8[16384]{0}', space=vmem, size = 0x4000, scoped, tag = 'output window, operand 0, single buffered']
    %7 = vsyncpa [#allocation3], 0
    %8 = vsyncpa [#allocation6], 0
    %9 = vsyncpa [#allocation4], 0
    // Predicated region
    $region2: #{tpu_custom_call.1} parent=1 // pred_check
      _
    $region3: #{tpu_custom_call.1} parent=1 // pred_check_branch
      %11 = sbr.rel (0) target = $region5
    $region4: #{tpu_custom_call.1} parent=1 // pred_region
      %s13 = ssub.s32 512, 512
      %14 = vsyncadd [#allocation3], %s13
      %s16 = sshll.u32 [#allocation2], 4
      %s17 = int_to_ptr.vmem [resolvable:$true] %s16
      %19 = dma.hbm_to_vmem [thread:$0]  %s0, 512, %s17, [#allocation3]
    $region5: #{tpu_custom_call.1} parent=1 // pred_fallthru
      _
    // Predicated region
    $region6: #{tpu_custom_call.1} parent=1 // pred_check
      _
    $region7: #{tpu_custom_call.1} parent=1 // pred_check_branch
      %21 = sbr.rel (0) target = $region9
    $region8: #{tpu_custom_call.1} parent=1 // pred_region
      %s23 = ssub.s32 64, 64
      %24 = vsyncadd [#allocation6], %s23
      %s26 = sshll.u32 [#allocation5], 4
      %s27 = int_to_ptr.vmem [resolvable:$true] %s26
      %29 = dma.hbm_to_vmem [thread:$0]  %s1, 64, %s27, [#allocation6]
    $region9: #{tpu_custom_call.1} parent=1 // pred_fallthru
      _
    // Predicated region
    $region10: #{tpu_custom_call.1} parent=1 // pred_check
      _
    $region11: #{tpu_custom_call.1} parent=1 // pred_check_branch
      %31 = sbr.rel (0) target = $region13
    $region12: #{tpu_custom_call.1} parent=1 // pred_region
      %32 = dma.done [#allocation3], 512
    $region13: #{tpu_custom_call.1} parent=1 // pred_fallthru
      _
    // Predicated region
    $region14: #{tpu_custom_call.1} parent=1 // pred_check
      _
    $region15: #{tpu_custom_call.1} parent=1 // pred_check_branch
      %34 = sbr.rel (0) target = $region17
    $region16: #{tpu_custom_call.1} parent=1 // pred_region
      %35 = dma.done [#allocation6], 64
    $region17: #{tpu_custom_call.1} parent=1 // pred_fallthru
      _
    %v36 = vld [vmem:[#allocation2] sm:$0xff]
    %v37 = vld [vmem:[#allocation2 + $0x8] sm:$0xff]
    %v38 = vld [vmem:[#allocation2 + $0x10] sm:$0xff]
    %v39 = vld [vmem:[#allocation2 + $0x18] sm:$0xff]
    %v40 = vmul.f32 %v36, 7.1414285
    %v41 = vmul.f32 %v37, 7.1414285
    %v42 = vmul.f32 %v38, 7.1414285
    %v43 = vmul.f32 %v39, 7.1414285
    %v44 = vld [vmem:[#allocation5] sm:$0xf]
    %v46 = vlaneseq
    %v47 = vshrl.u32 %v46, 7
    %v48 = vsub.s32 0, %v47
    %v49 = vrot.slane %v44, %v48
    %v50 = vlaneseq
    %v51 = vshrl.u32 %v50, 7
    %v52 = vsub.s32 1, %v51
    %v53 = vrot.slane %v44, %v52
    %v54 = vlaneseq
    %v55 = vshrl.u32 %v54, 7
    %v56 = vsub.s32 2, %v55
    %v57 = vrot.slane %v44, %v56
    %v58 = vlaneseq
    %v59 = vshrl.u32 %v58, 7
    %v60 = vsub.s32 3, %v59
    %v61 = vrot.slane %v44, %v60
    %v66 = vadd.f32 %v40, %v49
    %v67 = vadd.f32 %v41, %v53
    %v68 = vadd.f32 %v42, %v57
    %v69 = vadd.f32 %v43, %v61
    %70 = vst [vmem:[#allocation7] sm:$0xff] %v66
    %71 = vst [vmem:[#allocation7 + $0x8] sm:$0xff] %v67
    %72 = vst [vmem:[#allocation7 + $0x10] sm:$0xff] %v68
    %vm73 = vcmask 1031168
    %74 = vst.msk [vmem:[#allocation7 + $0x18] sm:$0xff] %vm73, %v69
    // Predicated region
    $region18: #{tpu_custom_call.1} parent=1 // pred_check
      _
    $region19: #{tpu_custom_call.1} parent=1 // pred_check_branch
      %76 = sbr.rel (0) target = $region21
    $region20: #{tpu_custom_call.1} parent=1 // pred_region
      %s78 = ssub.s32 512, 512
      %79 = vsyncadd [#allocation4], %s78
      %s81 = sshll.u32 [#allocation7], 4
      %s82 = int_to_ptr.vmem [resolvable:$true] %s81
      %84 = dma.vmem_to_hbm [thread:$0]  %s82, 512, %s2, [#allocation4]
    $region21: #{tpu_custom_call.1} parent=1 // pred_fallthru
      _
    // Predicated region
    $region22: #{tpu_custom_call.1} parent=1 // pred_check
      _
    $region23: #{tpu_custom_call.1} parent=1 // pred_check_branch
      %86 = sbr.rel (0) target = $region25
    $region24: #{tpu_custom_call.1} parent=1 // pred_region
      %87 = dma.done [#allocation4], 512
    $region25: #{tpu_custom_call.1} parent=1 // pred_fallthru
      _
    %88 = vsyncpa [#allocation3], 1
    %89 = vsyncpa [#allocation6], 1
    %90 = vsyncpa [#allocation4], 1

</llo_original>
